<compile_context>
chip_gen: v7x
topology: tpu7x:2x2x1
jax: 0.10.0
libtpu: 0.0.40
codegen_flags: <defaults>
</compile_context>

<pallas_src>
import functools

import jax
import jax.numpy as jnp
from jax import lax
from jax.experimental import pallas as pl
from jax.experimental.pallas import tpu as pltpu


def _embed_dropout_kernel(seed_ref, ids_ref, table_ref, out_ref, *,
                          dropout_rate, apply_dropout):
    """One token tile: vectorized row gather + (optional) dropout, one store."""
    T, Dp = out_ref.shape
    vocab_p = table_ref.shape[0]

    # --- embedding lookup: one-hot(ids) @ table on the MXU -----------------
    ids = ids_ref[...]                                          # (T, 1) int32
    iota_v = lax.broadcasted_iota(jnp.int32, (T, vocab_p), 1)   # (T, vocab_p)
    one_hot = (iota_v == ids).astype(table_ref.dtype)           # exact 0/1
    emb = jnp.dot(one_hot, table_ref[...],
                  preferred_element_type=jnp.float32,
                  precision=lax.Precision.HIGHEST)              # (T, Dp) f32

    # --- dropout (training): integer-hash PRNG, integer threshold ----------
    if apply_dropout and dropout_rate > 0.0:
        tile = pl.program_id(0)
        seed = seed_ref[0].astype(jnp.uint32)

        # global element index -> tiling-independent, uncorrelated stream
        gtok = (tile * T
                + lax.broadcasted_iota(jnp.int32, (T, Dp), 0)).astype(jnp.uint32)
        col = lax.broadcasted_iota(jnp.int32, (T, Dp), 1).astype(jnp.uint32)
        x = gtok * jnp.uint32(Dp) + col + seed * jnp.uint32(0x9E3779B9)

        # lowbias32 integer hash (uint32 ops wrap)
        x = x ^ (x >> jnp.uint32(16))
        x = x * jnp.uint32(0x7FEB352D)
        x = x ^ (x >> jnp.uint32(15))
        x = x * jnp.uint32(0x846CA68B)
        x = x ^ (x >> jnp.uint32(16))

        thresh = jnp.uint32(min(int(round(dropout_rate * (1 << 32))),
                                (1 << 32) - 1))
        keep = x >= thresh                                      # P(keep) = 1-p
        scale = jnp.float32(1.0 / (1.0 - dropout_rate))
        emb = jnp.where(keep, emb * scale, jnp.float32(0.0))

    out_ref[...] = emb.astype(out_ref.dtype)                    # single store


def embedding_layer_forward(indices, table, dropout_rate=0.0, *,
                            training=False, seed=0, tokens_per_tile=128):
    """Equivalent of EmbeddingLayer.forward.

    indices: int array [...,] of token ids (batched or unbatched).
    table:   [vocab, input_dim] embedding weights.
    Returns: [..., input_dim] embeddings (dropout applied iff training).
    """
    orig_shape = indices.shape
    vocab, dim = table.shape

    # Pad the embedding dim to a multiple of 128 lanes (lane-dense stores) and
    # the vocab to a multiple of 8 sublanes; padding is sliced off at the end.
    dim_p = ((dim + 127) // 128) * 128
    vocab_p = ((vocab + 7) // 8) * 8
    table_p = jnp.pad(table, ((0, vocab_p - vocab), (0, dim_p - dim)))

    flat = indices.reshape(-1).astype(jnp.int32)
    n_tokens = flat.shape[0]
    # Shrink the tile for tiny inputs (still a multiple of 8 sublanes) so we
    # don't compute on all-padding rows.
    tokens_per_tile = max(8, min(tokens_per_tile, ((n_tokens + 7) // 8) * 8))
    n_padded = pl.cdiv(n_tokens, tokens_per_tile) * tokens_per_tile
    flat = jnp.pad(flat, (0, n_padded - n_tokens))
    ids2d = flat.reshape(n_padded, 1)
    grid = (n_padded // tokens_per_tile,)

    seed_arr = jnp.array([seed], dtype=jnp.int32)

    kernel = functools.partial(
        _embed_dropout_kernel,
        dropout_rate=float(dropout_rate),
        apply_dropout=bool(training),
    )

    out = pl.pallas_call(
        kernel,
        out_shape=jax.ShapeDtypeStruct((n_padded, dim_p), table.dtype),
        grid_spec=pltpu.PrefetchScalarGridSpec(
            num_scalar_prefetch=1,                  # seed lands in SMEM
            grid=grid,
            in_specs=[
                # token ids for this tile (VMEM, vectorized use in kernel)
                pl.BlockSpec((tokens_per_tile, 1), lambda i, seed: (i, 0)),
                # full (small) embedding table resident in VMEM (fetched once)
                pl.BlockSpec((vocab_p, dim_p), lambda i, seed: (0, 0)),
            ],
            out_specs=pl.BlockSpec((tokens_per_tile, dim_p),
                                   lambda i, seed: (i, 0)),
        ),
        compiler_params=pltpu.CompilerParams(
            dimension_semantics=("parallel",)),     # independent token tiles
    )(seed_arr, ids2d, table_p)

    out = out[:n_tokens, :dim]
    return out.reshape(*orig_shape, dim)


if __name__ == "__main__":
    # Deterministic setup (synthetic weights, no checkpoint loading).
    input_dim = 32
    full_dict_size = 64
    embedding_dropout_rate = 0.1
    batch, sent_len = 2, 8

    key = jax.random.PRNGKey(0)
    k_tab, k_ids = jax.random.split(key)
    # nn.Embedding default init ~ N(0, 1)
    word_embedding = jax.random.normal(
        k_tab, (full_dict_size, input_dim), dtype=jnp.float32)
    indices = jax.random.randint(
        k_ids, (batch, sent_len), 0, full_dict_size, dtype=jnp.int32)

    ref = jnp.take(word_embedding, indices, axis=0)

    # Eval-mode forward (dropout is identity) — check against JAX reference.
    out_eval = embedding_layer_forward(
        indices, word_embedding, embedding_dropout_rate, training=False)
    out_eval = jax.block_until_ready(out_eval)
    assert out_eval.shape == (batch, sent_len, input_dim)
    assert jnp.allclose(out_eval, ref, atol=1e-5), "eval-mode lookup mismatch"

    # Training-mode forward (dropout mask generated in-kernel).
    out_train = embedding_layer_forward(
        indices, word_embedding, embedding_dropout_rate,
        training=True, seed=1234)
    out_train = jax.block_until_ready(out_train)
    assert out_train.shape == (batch, sent_len, input_dim)
    assert bool(jnp.all(jnp.isfinite(out_train)))
    # Kept elements must equal ref / (1 - p); dropped elements are exact zeros.
    kept = out_train != 0.0
    scale = 1.0 / (1.0 - embedding_dropout_rate)
    assert bool(jnp.all(jnp.where(kept,
                                  jnp.abs(out_train - ref * scale) < 1e-4,
                                  True)))
    dropped_frac = 1.0 - float(jnp.mean(kept.astype(jnp.float32)))
    assert dropped_frac < 0.5, f"implausible dropout fraction {dropped_frac}"

    print("KERNEL_OK")
</pallas_src>

<mosaic_0001>
module attributes {stable_mosaic.version = 11 : i64} {
  func.func @_embed_dropout_kernel(%arg0: i32, %arg1: memref<1xi32, #tpu.memory_space<smem>>, %arg2: memref<16x1xi32, #tpu.memory_space<vmem>>, %arg3: memref<64x128xf32, #tpu.memory_space<vmem>>, %arg4: memref<16x128xf32, #tpu.memory_space<vmem>>) attributes {dimension_semantics = [#tpu.dimension_semantics<parallel>], iteration_bounds = array<i64: 1>, scalar_prefetch = 1 : i64, scratch_operands = 0 : i64, tpu.core_type = #tpu.core_type<tc>, window_params = [{transform_indices = @transform_0, window_bounds = array<i64: 16, 1>}, {pipeline_mode = #tpu.pipeline_mode<synchronous>, transform_indices = @transform_1, window_bounds = array<i64: 64, 128>}, {transform_indices = @transform_2, window_bounds = array<i64: 16, 128>}]} {
    %c0 = arith.constant 0 : index
    %c0_0 = arith.constant 0 : index
    %0 = vector.load %arg2[%c0, %c0_0] : memref<16x1xi32, #tpu.memory_space<vmem>>, vector<16x1xi32>
    %1 = tpu.iota {dimensions = array<i32: 1>} : vector<16x64xi32>
    %2 = vector.broadcast %0 : vector<16x1xi32> to vector<16x64xi32>
    %3 = arith.cmpi eq, %1, %2 : vector<16x64xi32>
    %4 = arith.extui %3 : vector<16x64xi1> to vector<16x64xi32>
    %5 = arith.sitofp %4 : vector<16x64xi32> to vector<16x64xf32>
    %c0_1 = arith.constant 0 : index
    %c0_2 = arith.constant 0 : index
    %6 = vector.load %arg3[%c0_1, %c0_2] : memref<64x128xf32, #tpu.memory_space<vmem>>, vector<64x128xf32>
    %cst = arith.constant dense<0.000000e+00> : vector<16x128xf32>
    %7 = tpu.matmul %5, %6, %cst {dimension_numbers = #tpu.dot_dimension_numbers<[1], [0], [0], [1], [0, 0, 1, 1], [], []>, precision = #tpu.contract_precision<fp32>} : vector<16x64xf32>, vector<64x128xf32>, vector<16x128xf32> -> vector<16x128xf32>
    %c0_3 = arith.constant 0 : index
    %c0_4 = arith.constant 0 : index
    %8 = vector.load %arg4[%c0_3, %c0_4] : memref<16x128xf32, #tpu.memory_space<vmem>>, vector<16x128xf32>
    tpu.vector_store %arg4[%c0_3, %c0_4], %7 {strides = array<i32>} : memref<16x128xf32, #tpu.memory_space<vmem>>, vector<16x128xf32>,
    return
  }
  func.func @transform_0(%arg0: i32, %arg1: memref<1xi32, #tpu.memory_space<smem>>) -> (i32, i32) {
    %c0_i32 = arith.constant 0 : i32
    %c0_i32_0 = arith.constant 0 : i32
    return %arg0, %c0_i32 : i32, i32
  }
  func.func @transform_1(%arg0: i32, %arg1: memref<1xi32, #tpu.memory_space<smem>>) -> (i32, i32) {
    %c0_i32 = arith.constant 0 : i32
    %c0_i32_0 = arith.constant 0 : i32
    %c0_i32_1 = arith.constant 0 : i32
    return %c0_i32, %c0_i32_0 : i32, i32
  }
  func.func @transform_2(%arg0: i32, %arg1: memref<1xi32, #tpu.memory_space<smem>>) -> (i32, i32) {
    %c0_i32 = arith.constant 0 : i32
    %c0_i32_0 = arith.constant 0 : i32
    return %arg0, %c0_i32 : i32, i32
  }
}

</mosaic_0001>

<llo_original>
// kernel: tpu_custom_call.1
$region0: #{tpu_custom_call.1}
  #allocation0 [shape = 'u32[]', space=smem, size = 0x4, offset = 0x4, fixed_abs, tag = 'smem constant byte address 0x4 - core index']
  #allocation1 [shape = 'u32[144,128]{1,0:T(1,128)}', space=vmem, size = 0x12000, scoped, tag = 'internal scratch']
  #allocation2 [shape = 's32[1]{0}', space=sflag, size = 0x4, scoped, tag = 'scoped memory for tpu_custom_call.1']
  #allocation3 [shape = 's32[1]{0:T(128)S(6)}', space=smem, size = 0x200, scoped, tag = 'prefetched SMEM operand 0']
  %s0 = inlined_call_operand.<no memory space> [shape: s32[1], index: 0, kind: input, shape index: {}]
  %s1 = inlined_call_operand.vmem [shape: s32[16,1], index: 1, kind: input, shape index: {}]
  %s2 = inlined_call_operand.hbm [shape: f32[64,128], index: 2, kind: input, shape index: {}]
  %s3 = inlined_call_operand.hbm [shape: f32[16,128], index: 3, kind: output, shape index: {}]
  %s4 = sld [smem:[#allocation0]]
  $region22: #{tpu_custom_call.1} parent=0
    _
  %s6 = ssub.s32 1, %s4
  %s7 = scalar_select 0, %s6, %s4
  %8 = sst [smem:[#allocation3]] %s0
  $region1: #{tpu_custom_call.1} parent=0
    #allocation4 [shape = 'u8[32768]{0}', space=vmem, size = 0x8000, scoped, tag = 'input window, operand 2, single buffered']
    #allocation5 [shape = 's32[1]{0}', space=sflag, size = 0x4, scoped, tag = 'scoped memory for tpu_custom_call.1']
    #allocation6 [shape = 's32[1]{0}', space=sflag, size = 0x4, scoped, tag = 'scoped memory for tpu_custom_call.1']
    #allocation7 [shape = 'u8[8192]{0}', space=vmem, size = 0x2000, scoped, tag = 'output window, operand 0, single buffered']
    %9 = vsyncpa [#allocation5], 0
    %10 = vsyncpa [#allocation6], 0
    // Predicated region
    $region2: #{tpu_custom_call.1} parent=1 // pred_check
      _
    $region3: #{tpu_custom_call.1} parent=1 // pred_check_branch
      %12 = sbr.rel (0) target = $region5
    $region4: #{tpu_custom_call.1} parent=1 // pred_region
      _
    $region5: #{tpu_custom_call.1} parent=1 // pred_fallthru
      _
    // Predicated region
    $region6: #{tpu_custom_call.1} parent=1 // pred_check
      _
    $region7: #{tpu_custom_call.1} parent=1 // pred_check_branch
      %14 = sbr.rel (0) target = $region9
    $region8: #{tpu_custom_call.1} parent=1 // pred_region
      %s16 = ssub.s32 1024, 1024
      %17 = vsyncadd [#allocation5], %s16
      %s18 = sshll.u32 [#allocation4], 4
      %s19 = int_to_ptr.vmem [resolvable:$true] %s18
      %24 = dma.hbm_to_vmem [thread:$0]  %s2, 1024, %s19, [#allocation5], 128, 128, 8
    $region9: #{tpu_custom_call.1} parent=1 // pred_fallthru
      _
    // Predicated region
    $region10: #{tpu_custom_call.1} parent=1 // pred_check
      _
    $region11: #{tpu_custom_call.1} parent=1 // pred_check_branch
      %26 = sbr.rel (0) target = $region13
    $region12: #{tpu_custom_call.1} parent=1 // pred_region
      %27 = dma.done [#allocation5], 1024
    $region13: #{tpu_custom_call.1} parent=1 // pred_fallthru
      _
    %v28 = vld [vmem:[%s1] sm:$0xff]
    %v29 = vld [vmem:[%s1 + $0x8] sm:$0xff]
    %v30 = vlaneseq
    %v31 = vand.u32 %v30, 127
    %32 = vset.pattern.permute.xlu0 0
    %33 = vperm.xlu0 %32, %v28
    %v34 = vpop.permute.xlu0 %33
    %35 = vset.pattern.permute.xlu0 0
    %36 = vperm.xlu0 %35, %v29
    %v37 = vpop.permute.xlu0 %36
    %vm38 = vcmp.eq.s32.totalorder %v31, %v34
    %vm39 = vcmp.eq.s32.totalorder %v31, %v37
    %v40 = vsel %vm38, 1, 0
    %v41 = vsel %vm39, 1, 0
    %v42 = vcvt.s32.f32 %v40
    %v43 = vcvt.s32.f32 %v41
    %v44 = vld [vmem:[#allocation4] sm:$0xff]
    %v45 = vld [vmem:[#allocation4 + $0x8] sm:$0xff]
    %v46 = vld [vmem:[#allocation4 + $0x10] sm:$0xff]
    %v47 = vld [vmem:[#allocation4 + $0x18] sm:$0xff]
    %v48 = vld [vmem:[#allocation4 + $0x20] sm:$0xff]
    %v49 = vld [vmem:[#allocation4 + $0x28] sm:$0xff]
    %v50 = vld [vmem:[#allocation4 + $0x30] sm:$0xff]
    %v51 = vld [vmem:[#allocation4 + $0x38] sm:$0xff]
    %vm52 = vcmask 523264
    %v54 = vsel %vm52, %v42, 0
    %v57 = vsel %vm52, %v43, 0
    %59 = vmatprep.subr.mxu0 0.0
    %v60 = vand.u32 %v44, 4294901760
    %61 = vmatpush1.msra.mxu0 %v60
    %62 = vmatprep.subr.mxu0 0.0
    %v63 = vand.u32 %v45, 4294901760
    %64 = vmatpush1.msra.mxu0 %v63
    %65 = vmatprep.subr.mxu0 0.0
    %v66 = vand.u32 %v46, 4294901760
    %67 = vmatpush1.msra.mxu0 %v66
    %68 = vmatprep.subr.mxu0 0.0
    %v69 = vand.u32 %v47, 4294901760
    %70 = vmatpush1.msra.mxu0 %v69
    %71 = vmatprep.subr.mxu0 0.0
    %v72 = vand.u32 %v48, 4294901760
    %73 = vmatpush1.msra.mxu0 %v72
    %74 = vmatprep.subr.mxu0 0.0
    %v75 = vand.u32 %v49, 4294901760
    %76 = vmatpush1.msra.mxu0 %v75
    %77 = vmatprep.subr.mxu0 0.0
    %v78 = vand.u32 %v50, 4294901760
    %79 = vmatpush1.msra.mxu0 %v78
    %80 = vmatprep.subr.mxu0 0.0
    %v81 = vand.u32 %v51, 4294901760
    %82 = vmatpush1.msra.mxu0 %v81
    %83 = vmatprep.subr.mxu0 0.0
    %84 = vmatpush1.msra.mxu0 0.0
    %85 = vmatprep.subr.mxu0 0.0
    %86 = vmatpush1.msra.mxu0 0.0
    %87 = vmatprep.subr.mxu0 0.0
    %88 = vmatpush1.msra.mxu0 0.0
    %89 = vmatprep.subr.mxu0 0.0
    %90 = vmatpush1.msra.mxu0 0.0
    %91 = vmatprep.subr.mxu0 0.0
    %92 = vmatpush1.msra.mxu0 0.0
    %93 = vmatprep.subr.mxu0 0.0
    %94 = vmatpush1.msra.mxu0 0.0
    %95 = vmatprep.subr.mxu0 0.0
    %96 = vmatpush1.msra.mxu0 0.0
    %97 = vmatprep.subr.mxu0 0.0
    %98 = vmatpush1.msra.mxu0 0.0
    %99 = vmatprep.subr.mxu0 0.0
    %100 = vmatpush1.msra.mxu0 0.0
    %101 = vmatprep.subr.mxu0 0.0
    %102 = vmatpush1.msra.mxu0 0.0
    %103 = vmatprep.subr.mxu0 0.0
    %104 = vmatpush1.msra.mxu0 0.0
    %105 = vmatprep.subr.mxu0 0.0
    %106 = vmatpush1.msra.mxu0 0.0
    %107 = vmatprep.subr.mxu0 0.0
    %108 = vmatpush1.msra.mxu0 0.0
    %109 = vmatprep.subr.mxu0 0.0
    %110 = vmatpush1.msra.mxu0 0.0
    %111 = vmatprep.subr.mxu0 0.0
    %112 = vmatpush1.msra.mxu0 0.0
    %113 = vmatprep.subr.mxu0 0.0
    %114 = vmatpush1.msra.mxu0 0.0
    %115 = vmatprep.subr.mxu0 0.0
    %116 = vmatpush1.msra.mxu0 0.0
    %117 = vmatprep.subr.mxu0 0.0
    %118 = vmatpush1.msra.mxu0 0.0
    %119 = vmatprep.subr.mxu0 0.0
    %120 = vmatpush1.msra.mxu0 0.0
    %121 = vmatprep.subr.mxu0 0.0
    %122 = vmatpush1.msra.mxu0 0.0
    %123 = vmatprep.subr.mxu0 0.0
    %124 = vmatpush1.msra.mxu0 0.0
    %125 = vmatprep.subr.mxu0 0.0
    %126 = vmatpush1.msra.mxu0 0.0
    %127 = vmatprep.subr.mxu0 0.0
    %128 = vmatpush1.msra.mxu0 0.0
    %129 = vmatprep.subr.mxu0 0.0
    %130 = vmatpush1.msra.mxu0 0.0
    %131 = vmatprep.mubr.f32.mxu0 0.0
    %v132 = vand.u32 %v54, 4294901760
    %v133 = vsub.f32 %v54, %v132
    %v134 = vand.u32 %v133, 4294901760
    %v135 = vsub.f32 %v133, %v134
    %v136 = vand.u32 %v135, 4294901760
    %137 = vmatmul.mubr.f32.gmra.mrb[0].mxu0 %v136
    %v138 = vpop.f32.mrb[0].mxu0
    %v139 = vadd.f32 0.0, %v138
    %v140 = vpop.f32.mrb[0].mxu0
    %141 = vmatprep.mubr.f32.mxu0 0.0
    %v142 = vand.u32 %v57, 4294901760
    %v143 = vsub.f32 %v57, %v142
    %v144 = vand.u32 %v143, 4294901760
    %v145 = vsub.f32 %v143, %v144
    %v146 = vand.u32 %v145, 4294901760
    %147 = vmatmul.mubr.f32.gmra.mrb[0].mxu0 %v146
    %v148 = vpop.f32.mrb[0].mxu0
    %v149 = vadd.f32 0.0, %v148
    %v150 = vpop.f32.mrb[0].mxu0
    %151 = vdwg.mxu0
    %152 = vmatprep.subr.mxu0 0.0
    %v153 = vand.u32 %v44, 4294901760
    %v154 = vsub.f32 %v44, %v153
    %v155 = vand.u32 %v154, 4294901760
    %v156 = vsub.f32 %v154, %v155
    %v157 = vand.u32 %v156, 4294901760
    %158 = vmatpush1.msra.mxu0 %v157
    %159 = vmatprep.subr.mxu0 0.0
    %v160 = vand.u32 %v45, 4294901760
    %v161 = vsub.f32 %v45, %v160
    %v162 = vand.u32 %v161, 4294901760
    %v163 = vsub.f32 %v161, %v162
    %v164 = vand.u32 %v163, 4294901760
    %165 = vmatpush1.msra.mxu0 %v164
    %166 = vmatprep.subr.mxu0 0.0
    %v167 = vand.u32 %v46, 4294901760
    %v168 = vsub.f32 %v46, %v167
    %v169 = vand.u32 %v168, 4294901760
    %v170 = vsub.f32 %v168, %v169
    %v171 = vand.u32 %v170, 4294901760
    %172 = vmatpush1.msra.mxu0 %v171
    %173 = vmatprep.subr.mxu0 0.0
    %v174 = vand.u32 %v47, 4294901760
    %v175 = vsub.f32 %v47, %v174
    %v176 = vand.u32 %v175, 4294901760
    %v177 = vsub.f32 %v175, %v176
    %v178 = vand.u32 %v177, 4294901760
    %179 = vmatpush1.msra.mxu0 %v178
    %180 = vmatprep.subr.mxu0 0.0
    %v181 = vand.u32 %v48, 4294901760
    %v182 = vsub.f32 %v48, %v181
    %v183 = vand.u32 %v182, 4294901760
    %v184 = vsub.f32 %v182, %v183
    %v185 = vand.u32 %v184, 4294901760
    %186 = vmatpush1.msra.mxu0 %v185
    %187 = vmatprep.subr.mxu0 0.0
    %v188 = vand.u32 %v49, 4294901760
    %v189 = vsub.f32 %v49, %v188
    %v190 = vand.u32 %v189, 4294901760
    %v191 = vsub.f32 %v189, %v190
    %v192 = vand.u32 %v191, 4294901760
    %193 = vmatpush1.msra.mxu0 %v192
    %194 = vmatprep.subr.mxu0 0.0
    %v195 = vand.u32 %v50, 4294901760
    %v196 = vsub.f32 %v50, %v195
    %v197 = vand.u32 %v196, 4294901760
    %v198 = vsub.f32 %v196, %v197
    %v199 = vand.u32 %v198, 4294901760
    %200 = vmatpush1.msra.mxu0 %v199
    %201 = vmatprep.subr.mxu0 0.0
    %v202 = vand.u32 %v51, 4294901760
    %v203 = vsub.f32 %v51, %v202
    %v204 = vand.u32 %v203, 4294901760
    %v205 = vsub.f32 %v203, %v204
    %v206 = vand.u32 %v205, 4294901760
    %207 = vmatpush1.msra.mxu0 %v206
    %208 = vmatprep.subr.mxu0 0.0
    %209 = vmatpush1.msra.mxu0 0.0
    %210 = vmatprep.subr.mxu0 0.0
    %211 = vmatpush1.msra.mxu0 0.0
    %212 = vmatprep.subr.mxu0 0.0
    %213 = vmatpush1.msra.mxu0 0.0
    %214 = vmatprep.subr.mxu0 0.0
    %215 = vmatpush1.msra.mxu0 0.0
    %216 = vmatprep.subr.mxu0 0.0
    %217 = vmatpush1.msra.mxu0 0.0
    %218 = vmatprep.subr.mxu0 0.0
    %219 = vmatpush1.msra.mxu0 0.0
    %220 = vmatprep.subr.mxu0 0.0
    %221 = vmatpush1.msra.mxu0 0.0
    %222 = vmatprep.subr.mxu0 0.0
    %223 = vmatpush1.msra.mxu0 0.0
    %224 = vmatprep.subr.mxu0 0.0
    %225 = vmatpush1.msra.mxu0 0.0
    %226 = vmatprep.subr.mxu0 0.0
    %227 = vmatpush1.msra.mxu0 0.0
    %228 = vmatprep.subr.mxu0 0.0
    %229 = vmatpush1.msra.mxu0 0.0
    %230 = vmatprep.subr.mxu0 0.0
    %231 = vmatpush1.msra.mxu0 0.0
    %232 = vmatprep.subr.mxu0 0.0
    %233 = vmatpush1.msra.mxu0 0.0
    %234 = vmatprep.subr.mxu0 0.0
    %235 = vmatpush1.msra.mxu0 0.0
    %236 = vmatprep.subr.mxu0 0.0
    %237 = vmatpush1.msra.mxu0 0.0
    %238 = vmatprep.subr.mxu0 0.0
    %239 = vmatpush1.msra.mxu0 0.0
    %240 = vmatprep.subr.mxu0 0.0
    %241 = vmatpush1.msra.mxu0 0.0
    %242 = vmatprep.subr.mxu0 0.0
    %243 = vmatpush1.msra.mxu0 0.0
    %244 = vmatprep.subr.mxu0 0.0
    %245 = vmatpush1.msra.mxu0 0.0
    %246 = vmatprep.subr.mxu0 0.0
    %247 = vmatpush1.msra.mxu0 0.0
    %248 = vmatprep.subr.mxu0 0.0
    %249 = vmatpush1.msra.mxu0 0.0
    %250 = vmatprep.subr.mxu0 0.0
    %251 = vmatpush1.msra.mxu0 0.0
    %252 = vmatprep.subr.mxu0 0.0
    %253 = vmatpush1.msra.mxu0 0.0
    %254 = vmatprep.subr.mxu0 0.0
    %255 = vmatpush1.msra.mxu0 0.0
    %256 = vmatprep.mubr.f32.mxu0 0.0
    %v257 = vand.u32 %v54, 4294901760
    %258 = vmatmul.mubr.f32.gmra.mrb[0].mxu0 %v257
    %v259 = vpop.f32.mrb[0].mxu0
    %v260 = vadd.f32 %v139, %v259
    %v261 = vpop.f32.mrb[0].mxu0
    %262 = vmatprep.mubr.f32.mxu0 0.0
    %v263 = vand.u32 %v57, 4294901760
    %264 = vmatmul.mubr.f32.gmra.mrb[0].mxu0 %v263
    %v265 = vpop.f32.mrb[0].mxu0
    %v266 = vadd.f32 %v149, %v265
    %v267 = vpop.f32.mrb[0].mxu0
    %268 = vdwg.mxu0
    %269 = vmatprep.subr.mxu0 0.0
    %v270 = vand.u32 %v44, 4294901760
    %v271 = vsub.f32 %v44, %v270
    %272 = vmatpush1.msra.mxu0 %v271
    %273 = vmatprep.subr.mxu0 0.0
    %v274 = vand.u32 %v45, 4294901760
    %v275 = vsub.f32 %v45, %v274
    %276 = vmatpush1.msra.mxu0 %v275
    %277 = vmatprep.subr.mxu0 0.0
    %v278 = vand.u32 %v46, 4294901760
    %v279 = vsub.f32 %v46, %v278
    %280 = vmatpush1.msra.mxu0 %v279
    %281 = vmatprep.subr.mxu0 0.0
    %v282 = vand.u32 %v47, 4294901760
    %v283 = vsub.f32 %v47, %v282
    %284 = vmatpush1.msra.mxu0 %v283
    %285 = vmatprep.subr.mxu0 0.0
    %v286 = vand.u32 %v48, 4294901760
    %v287 = vsub.f32 %v48, %v286
    %288 = vmatpush1.msra.mxu0 %v287
    %289 = vmatprep.subr.mxu0 0.0
    %v290 = vand.u32 %v49, 4294901760
    %v291 = vsub.f32 %v49, %v290
    %292 = vmatpush1.msra.mxu0 %v291
    %293 = vmatprep.subr.mxu0 0.0
    %v294 = vand.u32 %v50, 4294901760
    %v295 = vsub.f32 %v50, %v294
    %296 = vmatpush1.msra.mxu0 %v295
    %297 = vmatprep.subr.mxu0 0.0
    %v298 = vand.u32 %v51, 4294901760
    %v299 = vsub.f32 %v51, %v298
    %300 = vmatpush1.msra.mxu0 %v299
    %301 = vmatprep.subr.mxu0 0.0
    %302 = vmatpush1.msra.mxu0 0.0
    %303 = vmatprep.subr.mxu0 0.0
    %304 = vmatpush1.msra.mxu0 0.0
    %305 = vmatprep.subr.mxu0 0.0
    %306 = vmatpush1.msra.mxu0 0.0
    %307 = vmatprep.subr.mxu0 0.0
    %308 = vmatpush1.msra.mxu0 0.0
    %309 = vmatprep.subr.mxu0 0.0
    %310 = vmatpush1.msra.mxu0 0.0
    %311 = vmatprep.subr.mxu0 0.0
    %312 = vmatpush1.msra.mxu0 0.0
    %313 = vmatprep.subr.mxu0 0.0
    %314 = vmatpush1.msra.mxu0 0.0
    %315 = vmatprep.subr.mxu0 0.0
    %316 = vmatpush1.msra.mxu0 0.0
    %317 = vmatprep.subr.mxu0 0.0
    %318 = vmatpush1.msra.mxu0 0.0
    %319 = vmatprep.subr.mxu0 0.0
    %320 = vmatpush1.msra.mxu0 0.0
    %321 = vmatprep.subr.mxu0 0.0
    %322 = vmatpush1.msra.mxu0 0.0
    %323 = vmatprep.subr.mxu0 0.0
    %324 = vmatpush1.msra.mxu0 0.0
    %325 = vmatprep.subr.mxu0 0.0
    %326 = vmatpush1.msra.mxu0 0.0
    %327 = vmatprep.subr.mxu0 0.0
    %328 = vmatpush1.msra.mxu0 0.0
    %329 = vmatprep.subr.mxu0 0.0
    %330 = vmatpush1.msra.mxu0 0.0
    %331 = vmatprep.subr.mxu0 0.0
    %332 = vmatpush1.msra.mxu0 0.0
    %333 = vmatprep.subr.mxu0 0.0
    %334 = vmatpush1.msra.mxu0 0.0
    %335 = vmatprep.subr.mxu0 0.0
    %336 = vmatpush1.msra.mxu0 0.0
    %337 = vmatprep.subr.mxu0 0.0
    %338 = vmatpush1.msra.mxu0 0.0
    %339 = vmatprep.subr.mxu0 0.0
    %340 = vmatpush1.msra.mxu0 0.0
    %341 = vmatprep.subr.mxu0 0.0
    %342 = vmatpush1.msra.mxu0 0.0
    %343 = vmatprep.subr.mxu0 0.0
    %344 = vmatpush1.msra.mxu0 0.0
    %345 = vmatprep.subr.mxu0 0.0
    %346 = vmatpush1.msra.mxu0 0.0
    %347 = vmatprep.subr.mxu0 0.0
    %348 = vmatpush1.msra.mxu0 0.0
    %349 = vmatprep.mubr.f32.mxu0 0.0
    %v350 = vand.u32 %v54, 4294901760
    %v351 = vsub.f32 %v54, %v350
    %352 = vmatmul.mubr.f32.gmra.mrb[0].mxu0 %v351
    %v353 = vpop.f32.mrb[0].mxu0
    %v354 = vadd.f32 %v260, %v353
    %v355 = vpop.f32.mrb[0].mxu0
    %356 = vmatprep.mubr.f32.mxu0 0.0
    %v357 = vand.u32 %v57, 4294901760
    %v358 = vsub.f32 %v57, %v357
    %359 = vmatmul.mubr.f32.gmra.mrb[0].mxu0 %v358
    %v360 = vpop.f32.mrb[0].mxu0
    %v361 = vadd.f32 %v266, %v360
    %v362 = vpop.f32.mrb[0].mxu0
    %363 = vdwg.mxu0
    %364 = vmatprep.subr.mxu0 0.0
    %v365 = vand.u32 %v44, 4294901760
    %366 = vmatpush1.msra.mxu0 %v365
    %367 = vmatprep.subr.mxu0 0.0
    %v368 = vand.u32 %v45, 4294901760
    %369 = vmatpush1.msra.mxu0 %v368
    %370 = vmatprep.subr.mxu0 0.0
    %v371 = vand.u32 %v46, 4294901760
    %372 = vmatpush1.msra.mxu0 %v371
    %373 = vmatprep.subr.mxu0 0.0
    %v374 = vand.u32 %v47, 4294901760
    %375 = vmatpush1.msra.mxu0 %v374
    %376 = vmatprep.subr.mxu0 0.0
    %v377 = vand.u32 %v48, 4294901760
    %378 = vmatpush1.msra.mxu0 %v377
    %379 = vmatprep.subr.mxu0 0.0
    %v380 = vand.u32 %v49, 4294901760
    %381 = vmatpush1.msra.mxu0 %v380
    %382 = vmatprep.subr.mxu0 0.0
    %v383 = vand.u32 %v50, 4294901760
    %384 = vmatpush1.msra.mxu0 %v383
    %385 = vmatprep.subr.mxu0 0.0
    %v386 = vand.u32 %v51, 4294901760
    %387 = vmatpush1.msra.mxu0 %v386
    %388 = vmatprep.subr.mxu0 0.0
    %389 = vmatpush1.msra.mxu0 0.0
    %390 = vmatprep.subr.mxu0 0.0
    %391 = vmatpush1.msra.mxu0 0.0
    %392 = vmatprep.subr.mxu0 0.0
    %393 = vmatpush1.msra.mxu0 0.0
    %394 = vmatprep.subr.mxu0 0.0
    %395 = vmatpush1.msra.mxu0 0.0
    %396 = vmatprep.subr.mxu0 0.0
    %397 = vmatpush1.msra.mxu0 0.0
    %398 = vmatprep.subr.mxu0 0.0
    %399 = vmatpush1.msra.mxu0 0.0
    %400 = vmatprep.subr.mxu0 0.0
    %401 = vmatpush1.msra.mxu0 0.0
    %402 = vmatprep.subr.mxu0 0.0
    %403 = vmatpush1.msra.mxu0 0.0
    %404 = vmatprep.subr.mxu0 0.0
    %405 = vmatpush1.msra.mxu0 0.0
    %406 = vmatprep.subr.mxu0 0.0
    %407 = vmatpush1.msra.mxu0 0.0
    %408 = vmatprep.subr.mxu0 0.0
    %409 = vmatpush1.msra.mxu0 0.0
    %410 = vmatprep.subr.mxu0 0.0
    %411 = vmatpush1.msra.mxu0 0.0
    %412 = vmatprep.subr.mxu0 0.0
    %413 = vmatpush1.msra.mxu0 0.0
    %414 = vmatprep.subr.mxu0 0.0
    %415 = vmatpush1.msra.mxu0 0.0
    %416 = vmatprep.subr.mxu0 0.0
    %417 = vmatpush1.msra.mxu0 0.0
    %418 = vmatprep.subr.mxu0 0.0
    %419 = vmatpush1.msra.mxu0 0.0
    %420 = vmatprep.subr.mxu0 0.0
    %421 = vmatpush1.msra.mxu0 0.0
    %422 = vmatprep.subr.mxu0 0.0
    %423 = vmatpush1.msra.mxu0 0.0
    %424 = vmatprep.subr.mxu0 0.0
    %425 = vmatpush1.msra.mxu0 0.0
    %426 = vmatprep.subr.mxu0 0.0
    %427 = vmatpush1.msra.mxu0 0.0
    %428 = vmatprep.subr.mxu0 0.0
    %429 = vmatpush1.msra.mxu0 0.0
    %430 = vmatprep.subr.mxu0 0.0
    %431 = vmatpush1.msra.mxu0 0.0
    %432 = vmatprep.subr.mxu0 0.0
    %433 = vmatpush1.msra.mxu0 0.0
    %434 = vmatprep.subr.mxu0 0.0
    %435 = vmatpush1.msra.mxu0 0.0
    %436 = vmatprep.mubr.f32.mxu0 0.0
    %v437 = vand.u32 %v54, 4294901760
    %v438 = vsub.f32 %v54, %v437
    %v439 = vand.u32 %v438, 4294901760
    %440 = vmatmul.mubr.f32.gmra.mrb[0].mxu0 %v439
    %v441 = vpop.f32.mrb[0].mxu0
    %v442 = vadd.f32 %v354, %v441
    %v443 = vpop.f32.mrb[0].mxu0
    %444 = vmatprep.mubr.f32.mxu0 0.0
    %v445 = vand.u32 %v57, 4294901760
    %v446 = vsub.f32 %v57, %v445
    %v447 = vand.u32 %v446, 4294901760
    %448 = vmatmul.mubr.f32.gmra.mrb[0].mxu0 %v447
    %v449 = vpop.f32.mrb[0].mxu0
    %v450 = vadd.f32 %v361, %v449
    %v451 = vpop.f32.mrb[0].mxu0
    %452 = vdwg.mxu0
    %453 = vmatprep.subr.mxu0 0.0
    %v454 = vand.u32 %v44, 4294901760
    %v455 = vsub.f32 %v44, %v454
    %v456 = vand.u32 %v455, 4294901760
    %457 = vmatpush1.msra.mxu0 %v456
    %458 = vmatprep.subr.mxu0 0.0
    %v459 = vand.u32 %v45, 4294901760
    %v460 = vsub.f32 %v45, %v459
    %v461 = vand.u32 %v460, 4294901760
    %462 = vmatpush1.msra.mxu0 %v461
    %463 = vmatprep.subr.mxu0 0.0
    %v464 = vand.u32 %v46, 4294901760
    %v465 = vsub.f32 %v46, %v464
    %v466 = vand.u32 %v465, 4294901760
    %467 = vmatpush1.msra.mxu0 %v466
    %468 = vmatprep.subr.mxu0 0.0
    %v469 = vand.u32 %v47, 4294901760
    %v470 = vsub.f32 %v47, %v469
    %v471 = vand.u32 %v470, 4294901760
    %472 = vmatpush1.msra.mxu0 %v471
    %473 = vmatprep.subr.mxu0 0.0
    %v474 = vand.u32 %v48, 4294901760
    %v475 = vsub.f32 %v48, %v474
    %v476 = vand.u32 %v475, 4294901760
    %477 = vmatpush1.msra.mxu0 %v476
    %478 = vmatprep.subr.mxu0 0.0
    %v479 = vand.u32 %v49, 4294901760
    %v480 = vsub.f32 %v49, %v479
    %v481 = vand.u32 %v480, 4294901760
    %482 = vmatpush1.msra.mxu0 %v481
    %483 = vmatprep.subr.mxu0 0.0
    %v484 = vand.u32 %v50, 4294901760
    %v485 = vsub.f32 %v50, %v484
    %v486 = vand.u32 %v485, 4294901760
    %487 = vmatpush1.msra.mxu0 %v486
    %488 = vmatprep.subr.mxu0 0.0
    %v489 = vand.u32 %v51, 4294901760
    %v490 = vsub.f32 %v51, %v489
    %v491 = vand.u32 %v490, 4294901760
    %492 = vmatpush1.msra.mxu0 %v491
    %493 = vmatprep.subr.mxu0 0.0
    %494 = vmatpush1.msra.mxu0 0.0
    %495 = vmatprep.subr.mxu0 0.0
    %496 = vmatpush1.msra.mxu0 0.0
    %497 = vmatprep.subr.mxu0 0.0
    %498 = vmatpush1.msra.mxu0 0.0
    %499 = vmatprep.subr.mxu0 0.0
    %500 = vmatpush1.msra.mxu0 0.0
    %501 = vmatprep.subr.mxu0 0.0
    %502 = vmatpush1.msra.mxu0 0.0
    %503 = vmatprep.subr.mxu0 0.0
    %504 = vmatpush1.msra.mxu0 0.0
    %505 = vmatprep.subr.mxu0 0.0
    %506 = vmatpush1.msra.mxu0 0.0
    %507 = vmatprep.subr.mxu0 0.0
    %508 = vmatpush1.msra.mxu0 0.0
    %509 = vmatprep.subr.mxu0 0.0
    %510 = vmatpush1.msra.mxu0 0.0
    %511 = vmatprep.subr.mxu0 0.0
    %512 = vmatpush1.msra.mxu0 0.0
    %513 = vmatprep.subr.mxu0 0.0
    %514 = vmatpush1.msra.mxu0 0.0
    %515 = vmatprep.subr.mxu0 0.0
    %516 = vmatpush1.msra.mxu0 0.0
    %517 = vmatprep.subr.mxu0 0.0
    %518 = vmatpush1.msra.mxu0 0.0
    %519 = vmatprep.subr.mxu0 0.0
    %520 = vmatpush1.msra.mxu0 0.0
    %521 = vmatprep.subr.mxu0 0.0
    %522 = vmatpush1.msra.mxu0 0.0
    %523 = vmatprep.subr.mxu0 0.0
    %524 = vmatpush1.msra.mxu0 0.0
    %525 = vmatprep.subr.mxu0 0.0
    %526 = vmatpush1.msra.mxu0 0.0
    %527 = vmatprep.subr.mxu0 0.0
    %528 = vmatpush1.msra.mxu0 0.0
    %529 = vmatprep.subr.mxu0 0.0
    %530 = vmatpush1.msra.mxu0 0.0
    %531 = vmatprep.subr.mxu0 0.0
    %532 = vmatpush1.msra.mxu0 0.0
    %533 = vmatprep.subr.mxu0 0.0
    %534 = vmatpush1.msra.mxu0 0.0
    %535 = vmatprep.subr.mxu0 0.0
    %536 = vmatpush1.msra.mxu0 0.0
    %537 = vmatprep.subr.mxu0 0.0
    %538 = vmatpush1.msra.mxu0 0.0
    %539 = vmatprep.subr.mxu0 0.0
    %540 = vmatpush1.msra.mxu0 0.0
    %541 = vmatprep.mubr.f32.mxu0 0.0
    %v542 = vand.u32 %v54, 4294901760
    %543 = vmatmul.mubr.f32.gmra.mrb[0].mxu0 %v542
    %v544 = vpop.f32.mrb[0].mxu0
    %v545 = vadd.f32 %v442, %v544
    %v546 = vpop.f32.mrb[0].mxu0
    %547 = vmatprep.mubr.f32.mxu0 0.0
    %v548 = vand.u32 %v57, 4294901760
    %549 = vmatmul.mubr.f32.gmra.mrb[0].mxu0 %v548
    %v550 = vpop.f32.mrb[0].mxu0
    %v551 = vadd.f32 %v450, %v550
    %v552 = vpop.f32.mrb[0].mxu0
    %553 = vdwg.mxu0
    %554 = vmatprep.subr.mxu0 0.0
    %v555 = vand.u32 %v44, 4294901760
    %556 = vmatpush1.msra.mxu0 %v555
    %557 = vmatprep.subr.mxu0 0.0
    %v558 = vand.u32 %v45, 4294901760
    %559 = vmatpush1.msra.mxu0 %v558
    %560 = vmatprep.subr.mxu0 0.0
    %v561 = vand.u32 %v46, 4294901760
    %562 = vmatpush1.msra.mxu0 %v561
    %563 = vmatprep.subr.mxu0 0.0
    %v564 = vand.u32 %v47, 4294901760
    %565 = vmatpush1.msra.mxu0 %v564
    %566 = vmatprep.subr.mxu0 0.0
    %v567 = vand.u32 %v48, 4294901760
    %568 = vmatpush1.msra.mxu0 %v567
    %569 = vmatprep.subr.mxu0 0.0
    %v570 = vand.u32 %v49, 4294901760
    %571 = vmatpush1.msra.mxu0 %v570
    %572 = vmatprep.subr.mxu0 0.0
    %v573 = vand.u32 %v50, 4294901760
    %574 = vmatpush1.msra.mxu0 %v573
    %575 = vmatprep.subr.mxu0 0.0
    %v576 = vand.u32 %v51, 4294901760
    %577 = vmatpush1.msra.mxu0 %v576
    %578 = vmatprep.subr.mxu0 0.0
    %579 = vmatpush1.msra.mxu0 0.0
    %580 = vmatprep.subr.mxu0 0.0
    %581 = vmatpush1.msra.mxu0 0.0
    %582 = vmatprep.subr.mxu0 0.0
    %583 = vmatpush1.msra.mxu0 0.0
    %584 = vmatprep.subr.mxu0 0.0
    %585 = vmatpush1.msra.mxu0 0.0
    %586 = vmatprep.subr.mxu0 0.0
    %587 = vmatpush1.msra.mxu0 0.0
    %588 = vmatprep.subr.mxu0 0.0
    %589 = vmatpush1.msra.mxu0 0.0
    %590 = vmatprep.subr.mxu0 0.0
    %591 = vmatpush1.msra.mxu0 0.0
    %592 = vmatprep.subr.mxu0 0.0
    %593 = vmatpush1.msra.mxu0 0.0
    %594 = vmatprep.subr.mxu0 0.0
    %595 = vmatpush1.msra.mxu0 0.0
    %596 = vmatprep.subr.mxu0 0.0
    %597 = vmatpush1.msra.mxu0 0.0
    %598 = vmatprep.subr.mxu0 0.0
    %599 = vmatpush1.msra.mxu0 0.0
    %600 = vmatprep.subr.mxu0 0.0
    %601 = vmatpush1.msra.mxu0 0.0
    %602 = vmatprep.subr.mxu0 0.0
    %603 = vmatpush1.msra.mxu0 0.0
    %604 = vmatprep.subr.mxu0 0.0
    %605 = vmatpush1.msra.mxu0 0.0
    %606 = vmatprep.subr.mxu0 0.0
    %607 = vmatpush1.msra.mxu0 0.0
    %608 = vmatprep.subr.mxu0 0.0
    %609 = vmatpush1.msra.mxu0 0.0
    %610 = vmatprep.subr.mxu0 0.0
    %611 = vmatpush1.msra.mxu0 0.0
    %612 = vmatprep.subr.mxu0 0.0
    %613 = vmatpush1.msra.mxu0 0.0
    %614 = vmatprep.subr.mxu0 0.0
    %615 = vmatpush1.msra.mxu0 0.0
    %616 = vmatprep.subr.mxu0 0.0
    %617 = vmatpush1.msra.mxu0 0.0
    %618 = vmatprep.subr.mxu0 0.0
    %619 = vmatpush1.msra.mxu0 0.0
    %620 = vmatprep.subr.mxu0 0.0
    %621 = vmatpush1.msra.mxu0 0.0
    %622 = vmatprep.subr.mxu0 0.0
    %623 = vmatpush1.msra.mxu0 0.0
    %624 = vmatprep.subr.mxu0 0.0
    %625 = vmatpush1.msra.mxu0 0.0
    %626 = vmatprep.mubr.f32.mxu0 0.0
    %v627 = vand.u32 %v54, 4294901760
    %628 = vmatmul.mubr.f32.gmra.mrb[0].mxu0 %v627
    %v629 = vpop.f32.mrb[0].mxu0
    %v630 = vadd.f32 %v545, %v629
    %v631 = vpop.f32.mrb[0].mxu0
    %632 = vmatprep.mubr.f32.mxu0 0.0
    %v633 = vand.u32 %v57, 4294901760
    %634 = vmatmul.mubr.f32.gmra.mrb[0].mxu0 %v633
    %v635 = vpop.f32.mrb[0].mxu0
    %v636 = vadd.f32 %v551, %v635
    %v637 = vpop.f32.mrb[0].mxu0
    %638 = vdwg.mxu0
    %639 = vst [vmem:[#allocation7] sm:$0xff] %v630
    %640 = vst [vmem:[#allocation7 + $0x8] sm:$0xff] %v636
    // Predicated region
    $region14: #{tpu_custom_call.1} parent=1 // pred_check
      _
    $region15: #{tpu_custom_call.1} parent=1 // pred_check_branch
      %642 = sbr.rel (0) target = $region17
    $region16: #{tpu_custom_call.1} parent=1 // pred_region
      %s644 = ssub.s32 256, 256
      %645 = vsyncadd [#allocation6], %s644
      %s646 = sshll.u32 [#allocation7], 4
      %s647 = int_to_ptr.vmem [resolvable:$true] %s646
      %652 = dma.vmem_to_hbm [thread:$0]  %s647, 256, %s3, [#allocation6], 128, 128, 8
    $region17: #{tpu_custom_call.1} parent=1 // pred_fallthru
      _
    // Predicated region
    $region18: #{tpu_custom_call.1} parent=1 // pred_check
      _
    $region19: #{tpu_custom_call.1} parent=1 // pred_check_branch
      %654 = sbr.rel (0) target = $region21
    $region20: #{tpu_custom_call.1} parent=1 // pred_region
      %655 = dma.done [#allocation6], 256
    $region21: #{tpu_custom_call.1} parent=1 // pred_fallthru
      _
    %656 = vsyncpa [#allocation5], 1
    %657 = vsyncpa [#allocation6], 1

</llo_original>
